<compile_context>
chip_gen: v5e
topology: v5e:2x2
jax: 0.10.0
libtpu: 0.0.40
codegen_flags: <defaults>
</compile_context>

<pallas_src>
import jax
import jax.numpy as jnp
from jax.experimental import pallas as pl
from jax.experimental.pallas import tpu as pltpu

_EPS = 1e-8   # TODO(synk): confirm RMSNorm eps of the PyTorch module (often 1e-6).


def _elu(z):
    # Clamp the transcendental argument: the discarded where-branch never
    # produces inf vregs.  (expm1 would be marginally nicer near 0 but exp has
    # a guaranteed Mosaic lowering.)
    return jnp.where(z > 0.0, z, jnp.exp(jnp.minimum(z, 0.0)) - 1.0)


def _rmsnorm(x, w):
    ms = jnp.mean(x * x, axis=-1, keepdims=True)
    return x * jax.lax.rsqrt(ms + _EPS) * w


# ---------------------------------------------------------------------------
# Fused kernel: MM_CosineGate -> conditional experts -> combine
# ---------------------------------------------------------------------------
def mcmoe_kernel(x1_ref, x2_ref, sim_ref, gates_ref, n1w_ref, n2w_ref,
                 wcat_ref, b1_ref, b2_ref,            # inputs
                 out_ref, logits_ref, topk_ref,       # outputs
                 h_ref, lg_smem, dma_sem):            # scratch
    x1 = x1_ref[...]                                               # (B, N, D) f32
    x2 = x2_ref[...]
    B, N, D = x1.shape
    M = B * N

    # ---------------- Stage 1: MM_CosineGate (VPU, full f32) ----------------
    pooled = 0.5 * (jnp.mean(x1, axis=1) + jnp.mean(x2, axis=1))   # (B, D)
    sim = sim_ref[...]                                             # (E, D)
    pn = pooled * jax.lax.rsqrt(
        jnp.sum(pooled * pooled, axis=-1, keepdims=True) + _EPS)
    sn = sim * jax.lax.rsqrt(
        jnp.sum(sim * sim, axis=-1, keepdims=True) + _EPS)
    # VPU multiply + lane reduction instead of a tiny f32 MXU matmul.
    cos = jnp.sum(pn[:, None, :] * sn[None, :, :], axis=-1)        # (B, E)
    logits = cos - gates_ref[...]                                  # (B, E)
    logits_ref[...] = logits
    topk_ref[...] = jnp.sum((logits > 0).astype(jnp.float32), axis=-1,
                            keepdims=True)

    # Hand the routing row to SMEM (tiny VMEM->SMEM DMA) so the expert branch
    # keys off scalar reads while staying inside a single pallas_call.
    cp = pltpu.make_async_copy(logits_ref, lg_smem, dma_sem)
    cp.start()
    cp.wait()

    # Reference semantics: the whole batch is routed on sample 0's logits.
    l_snn = lg_smem[0, 0]
    l_drop = lg_smem[0, 1]
    sel_snn = l_snn > 0.0
    sel_drop = l_drop > 0.0
    num_sel = sel_snn.astype(jnp.float32) + sel_drop.astype(jnp.float32)
    inv_sel = 1.0 / jnp.maximum(num_sel, 1.0)   # guard: nothing selected -> zeros

    # ---- Expert 1: DropX2Fusion (identity on x1) — always cheap ----
    w_drop = jnp.where(sel_drop, l_drop, 0.0) * inv_sel
    out_ref[...] = (w_drop * x1).astype(out_ref.dtype)

    # ---- Expert 0: SNNFusion — executed only when routed ----
    @pl.when(sel_snn)
    def _snn():
        # RMSNorm results land directly in the bf16 staging scratch
        # (no in-kernel concatenate copy).
        h_ref[0:M, :] = _rmsnorm(x1.reshape(M, D), n1w_ref[...]).astype(jnp.bfloat16)
        h_ref[M:2 * M, :] = _rmsnorm(x2.reshape(M, D), n2w_ref[...]).astype(jnp.bfloat16)
        # Merged MXU call: (2BN, D) x (D, 2D), bf16 operands, f32 accumulation.
        # TODO(synk): at production token counts split back into two
        #             (tile, D) x (D, D) matmuls (merged form discards the two
        #             cross quadrants = 2x MXU FLOPs; only OK while fill/drain
        #             dominates at BN = 16).
        y = jax.lax.dot_general(
            h_ref[...], wcat_ref[...], (((1,), (1,)), ((), ())),
            preferred_element_type=jnp.float32)                    # (2BN, 2D)
        y1 = _elu(y[:M, :D] + b1_ref[...]).reshape(B, N, D)        # snn1(norm1(x1))
        y2 = _elu(y[M:, D:] + b2_ref[...]).reshape(B, N, D)        # snn2(norm2(x2))
        snn = y1 + jnp.mean(y2, axis=1, keepdims=True)
        w_snn = l_snn * inv_sel
        out_ref[...] = out_ref[...] + (w_snn * snn).astype(out_ref.dtype)


# ---------------------------------------------------------------------------
# Wrapper
# ---------------------------------------------------------------------------
def preprocess_params(raw):
    """One-time parameter packing — keep this OFF the per-step critical path."""
    p = dict(raw)
    # Merge the two SNN_Block linear weights ((out, in) each) into one bf16
    # MXU operand of shape (2D, D).
    p["wcat"] = jnp.concatenate([raw["w1"], raw["w2"]], axis=0).astype(jnp.bfloat16)
    return p


def mcmoe_forward(x1, x2, p):
    B, N, D = x1.shape
    E = p["sim"].shape[0]

    cost = pl.CostEstimate(
        flops=int(2 * (2 * B * N) * D * (2 * D) + 2 * B * E * D),
        transcendentals=int(2 * B * N * D + 2 * B * N + B + E),
        bytes_accessed=int(3 * B * N * D * 4 + 2 * D * D * 2 + 4 * D * 4
                           + E * D * 4 + B * E * 4),
    )
    out_shapes = (jax.ShapeDtypeStruct((B, N, D), jnp.float32),    # outputs
                  jax.ShapeDtypeStruct((B, E), jnp.float32),       # logits
                  jax.ShapeDtypeStruct((B, 1), jnp.float32))       # top_k

    # Single kernel invocation (no grid): B*N = 16 tokens is latency-bound,
    # whole arrays live comfortably in VMEM on v5e/v6e/v7x.
    outputs, logits, top_k = pl.pallas_call(
        mcmoe_kernel,
        out_shape=out_shapes,
        scratch_shapes=[
            pltpu.VMEM((2 * B * N, D), jnp.bfloat16),   # bf16 matmul staging
            pltpu.SMEM((B, E), jnp.float32),            # routing scalars
            pltpu.SemaphoreType.DMA,                    # VMEM->SMEM handoff
        ],
        cost_estimate=cost,
    )(x1, x2, p["sim"], p["gates"], p["n1w"], p["n2w"],
      p["wcat"], p["b1"], p["b2"])

    balance_loss = 0
    return (outputs, balance_loss, None), logits, top_k


# ---------------------------------------------------------------------------
# Pure-JAX reference (for correctness check)
# ---------------------------------------------------------------------------
def mcmoe_reference(x1, x2, p):
    hp = jax.lax.Precision.HIGHEST
    h1 = _elu(jnp.einsum("bnd,ed->bne", _rmsnorm(x1, p["n1w"][0]), p["w1"],
                         precision=hp) + p["b1"][0])
    h2 = _elu(jnp.einsum("bnd,ed->bne", _rmsnorm(x2, p["n2w"][0]), p["w2"],
                         precision=hp) + p["b2"][0])
    expert_snn = h1 + h2.mean(axis=1, keepdims=True)
    expert_drop = x1
    pooled = 0.5 * (x1.mean(1) + x2.mean(1))
    pn = pooled * jax.lax.rsqrt(jnp.sum(pooled * pooled, -1, keepdims=True) + _EPS)
    sn = p["sim"] * jax.lax.rsqrt(jnp.sum(p["sim"] ** 2, -1, keepdims=True) + _EPS)
    logits = jnp.einsum("bd,ed->be", pn, sn, precision=hp) - p["gates"]
    w = jnp.where(logits[0] > 0, logits[0], 0.0)
    num_sel = jnp.maximum(jnp.sum((logits[0] > 0).astype(jnp.float32)), 1.0)
    out = (w[0] * expert_snn + w[1] * expert_drop) / num_sel
    top_k = jnp.sum((logits > 0).astype(jnp.float32), axis=-1, keepdims=True)
    return out, logits, top_k


if __name__ == "__main__":
    B, N, D, E = 2, 8, 256, 2   # batch, tokens, dim (module default dim=256), experts
    key = jax.random.PRNGKey(0)
    k = jax.random.split(key, 6)
    x1 = jax.random.normal(k[0], (B, N, D), jnp.float32)
    x2 = jax.random.normal(k[1], (B, N, D), jnp.float32)

    raw_params = dict(
        n1w=jnp.ones((1, D), jnp.float32),                            # RMSNorm weights
        n2w=jnp.ones((1, D), jnp.float32),
        w1=0.02 * jax.random.normal(k[2], (D, D), jnp.float32),       # SNN_Block linears
        b1=jnp.zeros((1, D), jnp.float32),
        w2=0.02 * jax.random.normal(k[3], (D, D), jnp.float32),
        b2=jnp.zeros((1, D), jnp.float32),
        sim=jax.random.normal(k[4], (E, D), jnp.float32),             # gate sim_matrix
        gates=jnp.full((1, E), -0.5, jnp.float32),                    # gate thresholds
    )
    params = preprocess_params(raw_params)   # hoisted one-time packing

    (outputs, balance_loss, _), logits, top_k = mcmoe_forward(x1, x2, params)
    jax.block_until_ready(outputs)

    ref_out, ref_logits, ref_topk = mcmoe_reference(x1, x2, raw_params)
    assert jnp.all(jnp.isfinite(outputs))
    assert jnp.allclose(logits, ref_logits, rtol=5e-3, atol=5e-3), "logits mismatch"
    assert jnp.allclose(top_k, ref_topk), "top_k mismatch"
    assert jnp.allclose(outputs, ref_out, rtol=5e-3, atol=5e-3), "output mismatch"

    print("KERNEL_OK")
</pallas_src>

<mosaic_0001>
module attributes {stable_mosaic.version = 11 : i64} {
  func.func @mcmoe_kernel(%arg0: memref<2x8x256xf32, #tpu.memory_space<vmem>>, %arg1: memref<2x8x256xf32, #tpu.memory_space<vmem>>, %arg2: memref<2x256xf32, #tpu.memory_space<vmem>>, %arg3: memref<1x2xf32, #tpu.memory_space<vmem>>, %arg4: memref<1x256xf32, #tpu.memory_space<vmem>>, %arg5: memref<1x256xf32, #tpu.memory_space<vmem>>, %arg6: memref<512x256xbf16, #tpu.memory_space<vmem>>, %arg7: memref<1x256xf32, #tpu.memory_space<vmem>>, %arg8: memref<1x256xf32, #tpu.memory_space<vmem>>, %arg9: memref<2x8x256xf32, #tpu.memory_space<vmem>>, %arg10: memref<2x2xf32, #tpu.memory_space<vmem>>, %arg11: memref<2x1xf32, #tpu.memory_space<vmem>>, %arg12: memref<32x256xbf16, #tpu.memory_space<vmem>>, %arg13: memref<2x2xf32, #tpu.memory_space<smem>>, %arg14: memref<!tpu.dma_semaphore, #tpu.memory_space<semaphore_mem>>) attributes {dimension_semantics = [], scalar_prefetch = 0 : i64, scratch_operands = 3 : i64, tpu.core_type = #tpu.core_type<tc>} {
    %c0 = arith.constant 0 : index
    %c0_0 = arith.constant 0 : index
    %c0_1 = arith.constant 0 : index
    %0 = vector.load %arg0[%c0, %c0_0, %c0_1] : memref<2x8x256xf32, #tpu.memory_space<vmem>>, vector<2x8x256xf32>
    %c0_2 = arith.constant 0 : index
    %c0_3 = arith.constant 0 : index
    %c0_4 = arith.constant 0 : index
    %1 = vector.load %arg1[%c0_2, %c0_3, %c0_4] : memref<2x8x256xf32, #tpu.memory_space<vmem>>, vector<2x8x256xf32>
    %cst = arith.constant dense<0.000000e+00> : vector<2x256xf32>
    %2 = vector.multi_reduction <add>, %0, %cst [1] : vector<2x8x256xf32> to vector<2x256xf32>
    %cst_5 = arith.constant 8.000000e+00 : f32
    %3 = vector.broadcast %cst_5 : f32 to vector<2x256xf32>
    %4 = arith.divf %2, %3 : vector<2x256xf32>
    %cst_6 = arith.constant dense<0.000000e+00> : vector<2x256xf32>
    %5 = vector.multi_reduction <add>, %1, %cst_6 [1] : vector<2x8x256xf32> to vector<2x256xf32>
    %cst_7 = arith.constant 8.000000e+00 : f32
    %6 = vector.broadcast %cst_7 : f32 to vector<2x256xf32>
    %7 = arith.divf %5, %6 : vector<2x256xf32>
    %8 = arith.addf %4, %7 : vector<2x256xf32>
    %cst_8 = arith.constant 5.000000e-01 : f32
    %9 = vector.broadcast %cst_8 : f32 to vector<2x256xf32>
    %10 = arith.mulf %9, %8 : vector<2x256xf32>
    %c0_9 = arith.constant 0 : index
    %c0_10 = arith.constant 0 : index
    %11 = vector.load %arg2[%c0_9, %c0_10] : memref<2x256xf32, #tpu.memory_space<vmem>>, vector<2x256xf32>
    %12 = arith.mulf %10, %10 : vector<2x256xf32>
    %cst_11 = arith.constant dense<0.000000e+00> : vector<2xf32>
    %13 = vector.multi_reduction <add>, %12, %cst_11 [1] : vector<2x256xf32> to vector<2xf32>
    %14 = vector.shape_cast %13 : vector<2xf32> to vector<2x1xf32>
    %cst_12 = arith.constant 9.99999993E-9 : f32
    %15 = vector.broadcast %cst_12 : f32 to vector<2x1xf32>
    %16 = arith.addf %14, %15 : vector<2x1xf32>
    %17 = math.rsqrt %16 : vector<2x1xf32>
    %18 = vector.broadcast %17 : vector<2x1xf32> to vector<2x256xf32>
    %19 = arith.mulf %10, %18 : vector<2x256xf32>
    %20 = arith.mulf %11, %11 : vector<2x256xf32>
    %cst_13 = arith.constant dense<0.000000e+00> : vector<2xf32>
    %21 = vector.multi_reduction <add>, %20, %cst_13 [1] : vector<2x256xf32> to vector<2xf32>
    %22 = vector.shape_cast %21 : vector<2xf32> to vector<2x1xf32>
    %cst_14 = arith.constant 9.99999993E-9 : f32
    %23 = vector.broadcast %cst_14 : f32 to vector<2x1xf32>
    %24 = arith.addf %22, %23 : vector<2x1xf32>
    %25 = math.rsqrt %24 : vector<2x1xf32>
    %26 = vector.broadcast %25 : vector<2x1xf32> to vector<2x256xf32>
    %27 = arith.mulf %11, %26 : vector<2x256xf32>
    %28 = vector.shape_cast %19 : vector<2x256xf32> to vector<2x1x256xf32>
    %29 = vector.shape_cast %27 : vector<2x256xf32> to vector<1x2x256xf32>
    %30 = vector.broadcast %28 : vector<2x1x256xf32> to vector<2x2x256xf32>
    %31 = vector.broadcast %29 : vector<1x2x256xf32> to vector<2x2x256xf32>
    %32 = arith.mulf %30, %31 : vector<2x2x256xf32>
    %cst_15 = arith.constant dense<0.000000e+00> : vector<2x2xf32>
    %33 = vector.multi_reduction <add>, %32, %cst_15 [2] : vector<2x2x256xf32> to vector<2x2xf32>
    %c0_16 = arith.constant 0 : index
    %c0_17 = arith.constant 0 : index
    %34 = vector.load %arg3[%c0_16, %c0_17] : memref<1x2xf32, #tpu.memory_space<vmem>>, vector<1x2xf32>
    %35 = vector.broadcast %34 : vector<1x2xf32> to vector<2x2xf32>
    %36 = arith.subf %33, %35 : vector<2x2xf32>
    %c0_18 = arith.constant 0 : index
    %c0_19 = arith.constant 0 : index
    %37 = vector.load %arg10[%c0_18, %c0_19] : memref<2x2xf32, #tpu.memory_space<vmem>>, vector<2x2xf32>
    tpu.vector_store %arg10[%c0_18, %c0_19], %36 {strides = array<i32>} : memref<2x2xf32, #tpu.memory_space<vmem>>, vector<2x2xf32>,
    %cst_20 = arith.constant 0.000000e+00 : f32
    %38 = vector.broadcast %cst_20 : f32 to vector<2x2xf32>
    %39 = arith.cmpf ogt, %36, %38 : vector<2x2xf32>
    %40 = arith.extui %39 : vector<2x2xi1> to vector<2x2xi32>
    %41 = arith.sitofp %40 : vector<2x2xi32> to vector<2x2xf32>
    %cst_21 = arith.constant dense<0.000000e+00> : vector<2xf32>
    %42 = vector.multi_reduction <add>, %41, %cst_21 [1] : vector<2x2xf32> to vector<2xf32>
    %43 = vector.shape_cast %42 : vector<2xf32> to vector<2x1xf32>
    %c0_22 = arith.constant 0 : index
    %c0_23 = arith.constant 0 : index
    %44 = vector.load %arg11[%c0_22, %c0_23] : memref<2x1xf32, #tpu.memory_space<vmem>>, vector<2x1xf32>
    tpu.vector_store %arg11[%c0_22, %c0_23], %43 {strides = array<i32>} : memref<2x1xf32, #tpu.memory_space<vmem>>, vector<2x1xf32>,
    tpu.enqueue_dma source(%arg10 : memref<2x2xf32, #tpu.memory_space<vmem>>) target(%arg13 : memref<2x2xf32, #tpu.memory_space<smem>>) target_semaphore(%arg14 : memref<!tpu.dma_semaphore, #tpu.memory_space<semaphore_mem>>)
    tpu.wait_dma2 semaphore(%arg14 : memref<!tpu.dma_semaphore, #tpu.memory_space<semaphore_mem>>) src(%arg10 : memref<2x2xf32, #tpu.memory_space<vmem>>) dst(%arg13 : memref<2x2xf32, #tpu.memory_space<smem>>)
    %c0_24 = arith.constant 0 : index
    %c0_25 = arith.constant 0 : index
    %45 = memref.load %arg13[%c0_24, %c0_25] : memref<2x2xf32, #tpu.memory_space<smem>>
    %c0_26 = arith.constant 0 : index
    %c1 = arith.constant 1 : index
    %46 = memref.load %arg13[%c0_26, %c1] : memref<2x2xf32, #tpu.memory_space<smem>>
    %cst_27 = arith.constant 0.000000e+00 : f32
    %47 = arith.cmpf ogt, %45, %cst_27 : f32
    %cst_28 = arith.constant 0.000000e+00 : f32
    %48 = arith.cmpf ogt, %46, %cst_28 : f32
    %49 = arith.extui %47 : i1 to i32
    %50 = arith.sitofp %49 : i32 to f32
    %51 = arith.extui %48 : i1 to i32
    %52 = arith.sitofp %51 : i32 to f32
    %53 = arith.addf %50, %52 : f32
    %cst_29 = arith.constant 1.000000e+00 : f32
    %54 = arith.maximumf %53, %cst_29 : f32
    %cst_30 = arith.constant 1.000000e+00 : f32
    %55 = arith.divf %cst_30, %54 : f32
    %cst_31 = arith.constant 0.000000e+00 : f32
    %56 = arith.select %48, %46, %cst_31 : f32
    %57 = arith.mulf %56, %55 : f32
    %58 = vector.broadcast %57 : f32 to vector<2x8x256xf32>
    %59 = arith.mulf %58, %0 : vector<2x8x256xf32>
    %c0_32 = arith.constant 0 : index
    %c0_33 = arith.constant 0 : index
    %c0_34 = arith.constant 0 : index
    %60 = vector.load %arg9[%c0_32, %c0_33, %c0_34] : memref<2x8x256xf32, #tpu.memory_space<vmem>>, vector<2x8x256xf32>
    tpu.vector_store %arg9[%c0_32, %c0_33, %c0_34], %59 {strides = array<i32>} : memref<2x8x256xf32, #tpu.memory_space<vmem>>, vector<2x8x256xf32>,
    %61 = arith.extui %47 : i1 to i32
    %c0_i32 = arith.constant 0 : i32
    %62 = arith.cmpi ne, %61, %c0_i32 : i32
    scf.if %62 {
      %63 = vector.shape_cast %0 : vector<2x8x256xf32> to vector<16x256xf32>
      %c0_35 = arith.constant 0 : index
      %c0_36 = arith.constant 0 : index
      %64 = vector.load %arg4[%c0_35, %c0_36] : memref<1x256xf32, #tpu.memory_space<vmem>>, vector<1x256xf32>
      %65 = arith.mulf %63, %63 : vector<16x256xf32>
      %cst_37 = arith.constant dense<0.000000e+00> : vector<16xf32>
      %66 = vector.multi_reduction <add>, %65, %cst_37 [1] : vector<16x256xf32> to vector<16xf32>
      %67 = vector.shape_cast %66 : vector<16xf32> to vector<16x1xf32>
      %cst_38 = arith.constant 2.560000e+02 : f32
      %68 = vector.broadcast %cst_38 : f32 to vector<16x1xf32>
      %69 = arith.divf %67, %68 : vector<16x1xf32>
      %cst_39 = arith.constant 9.99999993E-9 : f32
      %70 = vector.broadcast %cst_39 : f32 to vector<16x1xf32>
      %71 = arith.addf %69, %70 : vector<16x1xf32>
      %72 = math.rsqrt %71 : vector<16x1xf32>
      %73 = vector.broadcast %72 : vector<16x1xf32> to vector<16x256xf32>
      %74 = arith.mulf %63, %73 : vector<16x256xf32>
      %75 = vector.broadcast %64 : vector<1x256xf32> to vector<16x256xf32>
      %76 = arith.mulf %74, %75 : vector<16x256xf32>
      %77 = arith.truncf %76 : vector<16x256xf32> to vector<16x256xbf16>
      %c0_40 = arith.constant 0 : index
      %c0_41 = arith.constant 0 : index
      %78 = vector.load %arg12[%c0_40, %c0_41] : memref<32x256xbf16, #tpu.memory_space<vmem>>, vector<16x256xbf16>
      tpu.vector_store %arg12[%c0_40, %c0_41], %77 {strides = array<i32>} : memref<32x256xbf16, #tpu.memory_space<vmem>>, vector<16x256xbf16>,
      %79 = vector.shape_cast %1 : vector<2x8x256xf32> to vector<16x256xf32>
      %c0_42 = arith.constant 0 : index
      %c0_43 = arith.constant 0 : index
      %80 = vector.load %arg5[%c0_42, %c0_43] : memref<1x256xf32, #tpu.memory_space<vmem>>, vector<1x256xf32>
      %81 = arith.mulf %79, %79 : vector<16x256xf32>
      %cst_44 = arith.constant dense<0.000000e+00> : vector<16xf32>
      %82 = vector.multi_reduction <add>, %81, %cst_44 [1] : vector<16x256xf32> to vector<16xf32>
      %83 = vector.shape_cast %82 : vector<16xf32> to vector<16x1xf32>
      %cst_45 = arith.constant 2.560000e+02 : f32
      %84 = vector.broadcast %cst_45 : f32 to vector<16x1xf32>
      %85 = arith.divf %83, %84 : vector<16x1xf32>
      %cst_46 = arith.constant 9.99999993E-9 : f32
      %86 = vector.broadcast %cst_46 : f32 to vector<16x1xf32>
      %87 = arith.addf %85, %86 : vector<16x1xf32>
      %88 = math.rsqrt %87 : vector<16x1xf32>
      %89 = vector.broadcast %88 : vector<16x1xf32> to vector<16x256xf32>
      %90 = arith.mulf %79, %89 : vector<16x256xf32>
      %91 = vector.broadcast %80 : vector<1x256xf32> to vector<16x256xf32>
      %92 = arith.mulf %90, %91 : vector<16x256xf32>
      %93 = arith.truncf %92 : vector<16x256xf32> to vector<16x256xbf16>
      %c16 = arith.constant 16 : index
      %c0_47 = arith.constant 0 : index
      %94 = vector.load %arg12[%c16, %c0_47] : memref<32x256xbf16, #tpu.memory_space<vmem>>, vector<16x256xbf16>
      tpu.vector_store %arg12[%c16, %c0_47], %93 {strides = array<i32>} : memref<32x256xbf16, #tpu.memory_space<vmem>>, vector<16x256xbf16>,
      %c0_48 = arith.constant 0 : index
      %c0_49 = arith.constant 0 : index
      %95 = vector.load %arg12[%c0_48, %c0_49] : memref<32x256xbf16, #tpu.memory_space<vmem>>, vector<32x256xbf16>
      %c0_50 = arith.constant 0 : index
      %c0_51 = arith.constant 0 : index
      %96 = vector.load %arg6[%c0_50, %c0_51] : memref<512x256xbf16, #tpu.memory_space<vmem>>, vector<512x256xbf16>
      %cst_52 = arith.constant dense<0.000000e+00> : vector<32x512xf32>
      %97 = tpu.matmul %95, %96, %cst_52 {dimension_numbers = #tpu.dot_dimension_numbers<[1], [1], [0], [0], [0, 0, 1, 0], [], []>} : vector<32x256xbf16>, vector<512x256xbf16>, vector<32x512xf32> -> vector<32x512xf32>
      %98 = vector.extract_strided_slice %97 {offsets = [0, 0], sizes = [16, 256], strides = [1, 1]} : vector<32x512xf32> to vector<16x256xf32>
      %c0_53 = arith.constant 0 : index
      %c0_54 = arith.constant 0 : index
      %99 = vector.load %arg7[%c0_53, %c0_54] : memref<1x256xf32, #tpu.memory_space<vmem>>, vector<1x256xf32>
      %100 = vector.broadcast %99 : vector<1x256xf32> to vector<16x256xf32>
      %101 = arith.addf %98, %100 : vector<16x256xf32>
      %cst_55 = arith.constant 0.000000e+00 : f32
      %102 = vector.broadcast %cst_55 : f32 to vector<16x256xf32>
      %103 = arith.cmpf ogt, %101, %102 : vector<16x256xf32>
      %cst_56 = arith.constant 0.000000e+00 : f32
      %104 = vector.broadcast %cst_56 : f32 to vector<16x256xf32>
      %105 = arith.minimumf %101, %104 : vector<16x256xf32>
      %106 = math.exp %105 : vector<16x256xf32>
      %cst_57 = arith.constant 1.000000e+00 : f32
      %107 = vector.broadcast %cst_57 : f32 to vector<16x256xf32>
      %108 = arith.subf %106, %107 : vector<16x256xf32>
      %109 = arith.select %103, %101, %108 : vector<16x256xi1>, vector<16x256xf32>
      %110 = vector.shape_cast %109 : vector<16x256xf32> to vector<2x8x256xf32>
      %111 = vector.extract_strided_slice %97 {offsets = [16, 256], sizes = [16, 256], strides = [1, 1]} : vector<32x512xf32> to vector<16x256xf32>
      %c0_58 = arith.constant 0 : index
      %c0_59 = arith.constant 0 : index
      %112 = vector.load %arg8[%c0_58, %c0_59] : memref<1x256xf32, #tpu.memory_space<vmem>>, vector<1x256xf32>
      %113 = vector.broadcast %112 : vector<1x256xf32> to vector<16x256xf32>
      %114 = arith.addf %111, %113 : vector<16x256xf32>
      %cst_60 = arith.constant 0.000000e+00 : f32
      %115 = vector.broadcast %cst_60 : f32 to vector<16x256xf32>
      %116 = arith.cmpf ogt, %114, %115 : vector<16x256xf32>
      %cst_61 = arith.constant 0.000000e+00 : f32
      %117 = vector.broadcast %cst_61 : f32 to vector<16x256xf32>
      %118 = arith.minimumf %114, %117 : vector<16x256xf32>
      %119 = math.exp %118 : vector<16x256xf32>
      %cst_62 = arith.constant 1.000000e+00 : f32
      %120 = vector.broadcast %cst_62 : f32 to vector<16x256xf32>
      %121 = arith.subf %119, %120 : vector<16x256xf32>
      %122 = arith.select %116, %114, %121 : vector<16x256xi1>, vector<16x256xf32>
      %123 = vector.shape_cast %122 : vector<16x256xf32> to vector<2x8x256xf32>
      %cst_63 = arith.constant dense<0.000000e+00> : vector<2x256xf32>
      %124 = vector.multi_reduction <add>, %123, %cst_63 [1] : vector<2x8x256xf32> to vector<2x256xf32>
      %125 = vector.shape_cast %124 : vector<2x256xf32> to vector<2x1x256xf32>
      %cst_64 = arith.constant 8.000000e+00 : f32
      %126 = vector.broadcast %cst_64 : f32 to vector<2x1x256xf32>
      %127 = arith.divf %125, %126 : vector<2x1x256xf32>
      %128 = vector.broadcast %127 : vector<2x1x256xf32> to vector<2x8x256xf32>
      %129 = arith.addf %110, %128 : vector<2x8x256xf32>
      %130 = arith.mulf %45, %55 : f32
      %c0_65 = arith.constant 0 : index
      %c0_66 = arith.constant 0 : index
      %c0_67 = arith.constant 0 : index
      %131 = vector.load %arg9[%c0_65, %c0_66, %c0_67] : memref<2x8x256xf32, #tpu.memory_space<vmem>>, vector<2x8x256xf32>
      %132 = vector.broadcast %130 : f32 to vector<2x8x256xf32>
      %133 = arith.mulf %132, %129 : vector<2x8x256xf32>
      %134 = arith.addf %131, %133 : vector<2x8x256xf32>
      %c0_68 = arith.constant 0 : index
      %c0_69 = arith.constant 0 : index
      %c0_70 = arith.constant 0 : index
      %135 = vector.load %arg9[%c0_68, %c0_69, %c0_70] : memref<2x8x256xf32, #tpu.memory_space<vmem>>, vector<2x8x256xf32>
      tpu.vector_store %arg9[%c0_68, %c0_69, %c0_70], %134 {strides = array<i32>} : memref<2x8x256xf32, #tpu.memory_space<vmem>>, vector<2x8x256xf32>,
    } else {
    }
    return
  }
}

</mosaic_0001>

<llo_original>
// kernel: tpu_custom_call.1
$region0: #{tpu_custom_call.1}
  #allocation0 [shape = 'u32[]', space=smem, size = 0x4, offset = 0x4, fixed_abs, tag = 'smem constant byte address 0x4 - core index']
  #allocation1 [shape = 'u32[72,128]{1,0:T(1,128)}', space=vmem, size = 0x9000, scoped, tag = 'internal scratch']
  #allocation2 [shape = 'bf16[32,256]{1,0:T(8,128)(2,1)}', space=vmem, size = 0x4000, scoped, tag = 'scratch operand']
  #allocation3 [shape = 'f32[2,2]{1,0:T(2,128)}', space=smem, size = 0x400, scoped, tag = 'scratch operand']
  #allocation4 [shape = 's32[1]{0}', space=sflag, size = 0x4, scoped, tag = 'scratch operand']
  #allocation19 [shape = 's32[]', space=sflag, size = 0x4, offset = 0, fixed_abs, tag = 'sflag constant byte address 0x0 - dummy sync flag']
  #allocation20 [shape = 's32[]', space=sflag, size = 0x4, offset = 0, fixed_abs, tag = 'sflag constant byte address 0x0 - dummy sync flag']
  #allocation21 [shape = 'u32[]', space=smem, size = 0x4, offset = 0x44, fixed_abs, tag = 'smem constant byte address 0x44 - assertion arg 0']
  #allocation22 [shape = 'u32[]', space=smem, size = 0x4, offset = 0x48, fixed_abs, tag = 'smem constant byte address 0x48 - assertion arg 1']
  %s0 = inlined_call_operand.hbm [shape: f32[2,8,256], index: 0, kind: input, shape index: {}]
  %s1 = inlined_call_operand.hbm [shape: f32[2,8,256], index: 1, kind: input, shape index: {}]
  %s2 = inlined_call_operand.hbm [shape: f32[2,256], index: 2, kind: input, shape index: {}]
  %s3 = inlined_call_operand.hbm [shape: f32[1,2], index: 3, kind: input, shape index: {}]
  %s4 = inlined_call_operand.vmem [shape: f32[1,256], index: 4, kind: input, shape index: {}]
  %s5 = inlined_call_operand.vmem [shape: f32[1,256], index: 5, kind: input, shape index: {}]
  %s6 = inlined_call_operand.hbm [shape: bf16[512,256], index: 6, kind: input, shape index: {}]
  %s7 = inlined_call_operand.vmem [shape: f32[1,256], index: 7, kind: input, shape index: {}]
  %s8 = inlined_call_operand.hbm [shape: f32[1,256], index: 8, kind: input, shape index: {}]
  %s9 = inlined_call_operand.hbm [shape: f32[2,8,256], index: 9, kind: output, shape index: {0}]
  %s10 = inlined_call_operand.hbm [shape: f32[2,2], index: 10, kind: output, shape index: {1}]
  %s11 = inlined_call_operand.vmem [shape: f32[2,1], index: 11, kind: output, shape index: {2}]
  %12 = xla_tuple %s9, %s10, %s11
  %s13 = sld [smem:[#allocation0]]
  $region94: #{tpu_custom_call.1} parent=0
    _
  %s15 = ssub.s32 1, %s13
  %s16 = scalar_select 0, %s15, %s13
  $region1: #{tpu_custom_call.1} parent=0
    #allocation5 [shape = 'u8[16384]{0}', space=vmem, size = 0x4000, scoped, tag = 'input window, operand 0, single buffered']
    #allocation6 [shape = 's32[1]{0}', space=sflag, size = 0x4, scoped, tag = 'scoped memory for tpu_custom_call.1']
    #allocation7 [shape = 's32[1]{0}', space=sflag, size = 0x4, scoped, tag = 'scoped memory for tpu_custom_call.1']
    #allocation8 [shape = 'u8[16384]{0}', space=vmem, size = 0x4000, scoped, tag = 'input window, operand 1, single buffered']
    #allocation9 [shape = 's32[1]{0}', space=sflag, size = 0x4, scoped, tag = 'scoped memory for tpu_custom_call.1']
    #allocation10 [shape = 'u8[2048]{0}', space=vmem, size = 0x800, scoped, tag = 'input window, operand 2, single buffered']
    #allocation11 [shape = 'u8[512]{0}', space=vmem, size = 0x400, scoped, tag = 'input window, operand 3, single buffered']
    #allocation12 [shape = 's32[1]{0}', space=sflag, size = 0x4, scoped, tag = 'scoped memory for tpu_custom_call.1']
    #allocation13 [shape = 'u8[262144]{0}', space=vmem, size = 0x40000, scoped, tag = 'input window, operand 6, single buffered']
    #allocation14 [shape = 'u8[1024]{0}', space=vmem, size = 0x400, scoped, tag = 'input window, operand 8, single buffered']
    #allocation15 [shape = 's32[1]{0}', space=sflag, size = 0x4, scoped, tag = 'scoped memory for tpu_custom_call.1']
    #allocation16 [shape = 'u8[16384]{0}', space=vmem, size = 0x4000, scoped, tag = 'output window, operand 0, single buffered']
    #allocation17 [shape = 'u8[1024]{0}', space=vmem, size = 0x400, scoped, tag = 'output window, operand 1, single buffered']
    #allocation18 [shape = 's32[1]{0}', space=sflag, size = 0x4, scoped, tag = 'scoped memory for tpu_custom_call.1']
    %17 = vsyncpa [#allocation6], 0
    %18 = vsyncpa [#allocation9], 0
    %19 = vsyncpa [#allocation12], 0
    %20 = vsyncpa [#allocation15], 0
    %21 = vsyncpa [#allocation7], 0
    %22 = vsyncpa [#allocation18], 0
    // Predicated region
    $region2: #{tpu_custom_call.1} parent=1 // pred_check
      _
    $region3: #{tpu_custom_call.1} parent=1 // pred_check_branch
      %24 = sbr.rel (0) target = $region5
    $region4: #{tpu_custom_call.1} parent=1 // pred_region
      %26 = vsyncadd [#allocation6], 0
      %s27 = sshll.u32 %s0, 4
      %s28 = int_to_ptr.hbm [resolvable:$true] %s27
      %s29 = sshll.u32 [#allocation5], 4
      %s30 = int_to_ptr.vmem [resolvable:$true] %s29
      %35 = dma.hbm_to_vmem [thread:$0]  %s28, 512, %s30, [#allocation6], 256, 256, 16
    $region5: #{tpu_custom_call.1} parent=1 // pred_fallthru
      _
    // Predicated region
    $region6: #{tpu_custom_call.1} parent=1 // pred_check
      _
    $region7: #{tpu_custom_call.1} parent=1 // pred_check_branch
      %37 = sbr.rel (0) target = $region9
    $region8: #{tpu_custom_call.1} parent=1 // pred_region
      %39 = vsyncadd [#allocation9], 0
      %s40 = sshll.u32 %s1, 4
      %s41 = int_to_ptr.hbm [resolvable:$true] %s40
      %s42 = sshll.u32 [#allocation8], 4
      %s43 = int_to_ptr.vmem [resolvable:$true] %s42
      %48 = dma.hbm_to_vmem [thread:$0]  %s41, 512, %s43, [#allocation9], 256, 256, 16
    $region9: #{tpu_custom_call.1} parent=1 // pred_fallthru
      _
    // Predicated region
    $region10: #{tpu_custom_call.1} parent=1 // pred_check
      _
    $region11: #{tpu_custom_call.1} parent=1 // pred_check_branch
      %50 = sbr.rel (0) target = $region13
    $region12: #{tpu_custom_call.1} parent=1 // pred_region
      %52 = vsyncadd [#allocation9], 0
      %s54 = sshll.u32 %s2, 4
      %s55 = int_to_ptr.hbm [resolvable:$true] %s54
      %s56 = sshll.u32 [#allocation10], 4
      %s57 = int_to_ptr.vmem [resolvable:$true] %s56
      %59 = dma.hbm_to_vmem [thread:$0]  %s55, 64, %s57, [#allocation9]
    $region13: #{tpu_custom_call.1} parent=1 // pred_fallthru
      _
    // Predicated region
    $region14: #{tpu_custom_call.1} parent=1 // pred_check
      _
    $region15: #{tpu_custom_call.1} parent=1 // pred_check_branch
      %61 = sbr.rel (0) target = $region17
    $region16: #{tpu_custom_call.1} parent=1 // pred_region
      %63 = vsyncadd [#allocation12], 0
      %s65 = sshll.u32 %s3, 4
      %s66 = int_to_ptr.hbm [resolvable:$true] %s65
      %s67 = sshll.u32 [#allocation11], 4
      %s68 = int_to_ptr.vmem [resolvable:$true] %s67
      %70 = dma.hbm_to_vmem [thread:$0]  %s66, 16, %s68, [#allocation12]
    $region17: #{tpu_custom_call.1} parent=1 // pred_fallthru
      _
    // Predicated region
    $region18: #{tpu_custom_call.1} parent=1 // pred_check
      _
    $region19: #{tpu_custom_call.1} parent=1 // pred_check_branch
      %72 = sbr.rel (0) target = $region21
    $region20: #{tpu_custom_call.1} parent=1 // pred_region
      _
    $region21: #{tpu_custom_call.1} parent=1 // pred_fallthru
      _
    // Predicated region
    $region22: #{tpu_custom_call.1} parent=1 // pred_check
      _
    $region23: #{tpu_custom_call.1} parent=1 // pred_check_branch
      %74 = sbr.rel (0) target = $region25
    $region24: #{tpu_custom_call.1} parent=1 // pred_region
      _
    $region25: #{tpu_custom_call.1} parent=1 // pred_fallthru
      _
    // Predicated region
    $region26: #{tpu_custom_call.1} parent=1 // pred_check
      _
    $region27: #{tpu_custom_call.1} parent=1 // pred_check_branch
      %76 = sbr.rel (0) target = $region29
    $region28: #{tpu_custom_call.1} parent=1 // pred_region
      %78 = vsyncadd [#allocation12], 0
      %s79 = sshll.u32 %s6, 4
      %s80 = int_to_ptr.hbm [resolvable:$true] %s79
      %s81 = sshll.u32 [#allocation13], 4
      %s82 = int_to_ptr.vmem [resolvable:$true] %s81
      %87 = dma.hbm_to_vmem [thread:$0]  %s80, 8192, %s82, [#allocation12], 128, 128, 8
    $region29: #{tpu_custom_call.1} parent=1 // pred_fallthru
      _
    // Predicated region
    $region30: #{tpu_custom_call.1} parent=1 // pred_check
      _
    $region31: #{tpu_custom_call.1} parent=1 // pred_check_branch
      %89 = sbr.rel (0) target = $region33
    $region32: #{tpu_custom_call.1} parent=1 // pred_region
      _
    $region33: #{tpu_custom_call.1} parent=1 // pred_fallthru
      _
    // Predicated region
    $region34: #{tpu_custom_call.1} parent=1 // pred_check
      _
    $region35: #{tpu_custom_call.1} parent=1 // pred_check_branch
      %91 = sbr.rel (0) target = $region37
    $region36: #{tpu_custom_call.1} parent=1 // pred_region
      %93 = vsyncadd [#allocation15], 0
      %s95 = sshll.u32 %s8, 4
      %s96 = int_to_ptr.hbm [resolvable:$true] %s95
      %s97 = sshll.u32 [#allocation14], 4
      %s98 = int_to_ptr.vmem [resolvable:$true] %s97
      %100 = dma.hbm_to_vmem [thread:$0]  %s96, 32, %s98, [#allocation15]
    $region37: #{tpu_custom_call.1} parent=1 // pred_fallthru
      _
    // Predicated region
    $region38: #{tpu_custom_call.1} parent=1 // pred_check
      _
    $region39: #{tpu_custom_call.1} parent=1 // pred_check_branch
      %102 = sbr.rel (0) target = $region41
    $region40: #{tpu_custom_call.1} parent=1 // pred_region
      %104 = dma.done [#allocation6], 512
    $region41: #{tpu_custom_call.1} parent=1 // pred_fallthru
      _
    // Predicated region
    $region42: #{tpu_custom_call.1} parent=1 // pred_check
      _
    $region43: #{tpu_custom_call.1} parent=1 // pred_check_branch
      %106 = sbr.rel (0) target = $region45
    $region44: #{tpu_custom_call.1} parent=1 // pred_region
      %108 = dma.done [#allocation9], 512
    $region45: #{tpu_custom_call.1} parent=1 // pred_fallthru
      _
    // Predicated region
    $region46: #{tpu_custom_call.1} parent=1 // pred_check
      _
    $region47: #{tpu_custom_call.1} parent=1 // pred_check_branch
      %110 = sbr.rel (0) target = $region49
    $region48: #{tpu_custom_call.1} parent=1 // pred_region
      %112 = dma.done [#allocation9], 64
    $region49: #{tpu_custom_call.1} parent=1 // pred_fallthru
      _
    // Predicated region
    $region50: #{tpu_custom_call.1} parent=1 // pred_check
      _
    $region51: #{tpu_custom_call.1} parent=1 // pred_check_branch
      %114 = sbr.rel (0) target = $region53
    $region52: #{tpu_custom_call.1} parent=1 // pred_region
      %116 = dma.done [#allocation12], 16
    $region53: #{tpu_custom_call.1} parent=1 // pred_fallthru
      _
    // Predicated region
    $region54: #{tpu_custom_call.1} parent=1 // pred_check
      _
    $region55: #{tpu_custom_call.1} parent=1 // pred_check_branch
      %118 = sbr.rel (0) target = $region57
    $region56: #{tpu_custom_call.1} parent=1 // pred_region
      %120 = dma.done [#allocation12], 8192
    $region57: #{tpu_custom_call.1} parent=1 // pred_fallthru
      _
    // Predicated region
    $region58: #{tpu_custom_call.1} parent=1 // pred_check
      _
    $region59: #{tpu_custom_call.1} parent=1 // pred_check_branch
      %122 = sbr.rel (0) target = $region61
    $region60: #{tpu_custom_call.1} parent=1 // pred_region
      %124 = dma.done [#allocation15], 32
    $region61: #{tpu_custom_call.1} parent=1 // pred_fallthru
      _
    %v125 = vld [vmem:[#allocation5] sm:$0xff]
    %v126 = vld [vmem:[#allocation5 + $0x8] sm:$0xff]
    %v127 = vld [vmem:[#allocation5 + $0x10] sm:$0xff]
    %v128 = vld [vmem:[#allocation5 + $0x18] sm:$0xff]
    %v129 = vld [vmem:[#allocation8] sm:$0xff]
    %v130 = vld [vmem:[#allocation8 + $0x8] sm:$0xff]
    %v131 = vld [vmem:[#allocation8 + $0x10] sm:$0xff]
    %v132 = vld [vmem:[#allocation8 + $0x18] sm:$0xff]
    %v133 = vrot.slane %v125, 4
    %v134 = vadd.f32 %v125, %v133
    %v135 = vrot.slane %v134, 2
    %v136 = vadd.f32 %v134, %v135
    %v137 = vrot.slane %v136, 1
    %v138 = vadd.f32 %v136, %v137
    %v139 = vrot.slane %v126, 4
    %v140 = vadd.f32 %v126, %v139
    %v141 = vrot.slane %v140, 2
    %v142 = vadd.f32 %v140, %v141
    %v143 = vrot.slane %v142, 1
    %v144 = vadd.f32 %v142, %v143
    %v145 = vrot.slane %v127, 4
    %v146 = vadd.f32 %v127, %v145
    %v147 = vrot.slane %v146, 2
    %v148 = vadd.f32 %v146, %v147
    %v149 = vrot.slane %v148, 1
    %v150 = vadd.f32 %v148, %v149
    %v151 = vrot.slane %v128, 4
    %v152 = vadd.f32 %v128, %v151
    %v153 = vrot.slane %v152, 2
    %v154 = vadd.f32 %v152, %v153
    %v155 = vrot.slane %v154, 1
    %v156 = vadd.f32 %v154, %v155
    %v157 = vrcp.pop 8.0
    %v158 = vmul.f32 8.0, %v157
    %v159 = vsub.f32 1.0, %v158
    %v160 = vmul.f32 %v157, %v159
    %v161 = vadd.f32 %v157, %v160
    %vm162 = vweird.f32 %v157
    %v163 = vsel %vm162, %v157, %v161
    %v164 = vmul.f32 %v138, %v163
    %v165 = vmul.f32 %v144, %v163
    %v166 = vmul.f32 %v150, %v163
    %v167 = vmul.f32 %v156, %v163
    %v168 = vrot.slane %v129, 4
    %v169 = vadd.f32 %v129, %v168
    %v170 = vrot.slane %v169, 2
    %v171 = vadd.f32 %v169, %v170
    %v172 = vrot.slane %v171, 1
    %v173 = vadd.f32 %v171, %v172
    %v174 = vrot.slane %v130, 4
    %v175 = vadd.f32 %v130, %v174
    %v176 = vrot.slane %v175, 2
    %v177 = vadd.f32 %v175, %v176
    %v178 = vrot.slane %v177, 1
    %v179 = vadd.f32 %v177, %v178
    %v180 = vrot.slane %v131, 4
    %v181 = vadd.f32 %v131, %v180
    %v182 = vrot.slane %v181, 2
    %v183 = vadd.f32 %v181, %v182
    %v184 = vrot.slane %v183, 1
    %v185 = vadd.f32 %v183, %v184
    %v186 = vrot.slane %v132, 4
    %v187 = vadd.f32 %v132, %v186
    %v188 = vrot.slane %v187, 2
    %v189 = vadd.f32 %v187, %v188
    %v190 = vrot.slane %v189, 1
    %v191 = vadd.f32 %v189, %v190
    %v192 = vmul.f32 %v173, %v163
    %v193 = vmul.f32 %v179, %v163
    %v194 = vmul.f32 %v185, %v163
    %v195 = vmul.f32 %v191, %v163
    %v196 = vadd.f32 %v164, %v192
    %v197 = vadd.f32 %v165, %v193
    %v198 = vadd.f32 %v166, %v194
    %v199 = vadd.f32 %v167, %v195
    %v200 = vmul.f32 %v196, 0.5
    %v201 = vmul.f32 %v197, 0.5
    %v202 = vmul.f32 %v198, 0.5
    %v203 = vmul.f32 %v199, 0.5
    %v204 = vld [vmem:[#allocation10] sm:$0xf]
    %v205 = vmul.f32 %v200, %v200
    %v206 = vmul.f32 %v201, %v201
    %v207 = vmul.f32 %v202, %v202
    %v208 = vmul.f32 %v203, %v203
    %vm213 = vcmask 1041409
    %v214 = vsel %vm213, %v207, %v205
    %v215 = vsel %vm213, %v208, %v206
    %vm218 = vcmask 1041408
    %v219 = vsel %vm218, %v214, 0.0
    %v220 = vsel %vm218, %v215, 0.0
    %v221 = vadd.f32 %v219, %v220
    %222 = vadd.xlane.f32.xlu0 %v221
    %v223 = vpop.xlane.xlu0 %222
    %v224 = vadd.f32 %v223, 1e-08
    %v225 = vrsqrt.pop %v224
    %v226 = vmul.f32 %v225, %v224
    %v227 = vmul.f32 %v226, %v225
    %v228 = vmul.f32 0.5, %v227
    %v229 = vsub.f32 1.5, %v228
    %v230 = vmul.f32 %v225, %v229
    %vm231 = vweird.f32 %v224
    %vm232 = vweird.f32 %v225
    %vm233 = vmor %vm231, %vm232
    %v234 = vsel %vm233, %v225, %v230
    %v236 = vrot.slane %v234, 1
    %v239 = vmul.f32 %v200, %v234
    %v240 = vmul.f32 %v201, %v234
    %v241 = vmul.f32 %v202, %v236
    %v242 = vmul.f32 %v203, %v236
    %v243 = vmul.f32 %v204, %v204
    %245 = vst [vmem:[#allocation1] ss:$4 sm:$0xff] %v243
    %v246 = vld.sshfl [vmem:[#allocation1] sm:$0xff pattern:$0x73625140]
    %v247 = vld.sshfl [vmem:[#allocation1 + $0x8] sm:$0xff pattern:$0x73625140]
    %v250 = vsel %vm218, %v246, 0.0
    %v251 = vsel %vm218, %v247, 0.0
    %v252 = vadd.f32 %v250, %v251
    %253 = vadd.xlane.f32.xlu0 %v252
    %v254 = vpop.xlane.xlu0 %253
    %v255 = vadd.f32 %v254, 1e-08
    %v256 = vrsqrt.pop %v255
    %v257 = vmul.f32 %v256, %v255
    %v258 = vmul.f32 %v257, %v256
    %v259 = vmul.f32 0.5, %v258
    %v260 = vsub.f32 1.5, %v259
    %v261 = vmul.f32 %v256, %v260
    %vm262 = vweird.f32 %v255
    %vm263 = vweird.f32 %v256
    %vm264 = vmor %vm262, %vm263
    %v265 = vsel %vm264, %v256, %v261
    %v268 = vunpack.c.l.s4 269488144
    %v269 = vunpack.c.0.s8 %v268
    %v270 = vperm.slane %v265, %v269
    %v272 = vmul.f32 %v204, %v270
    %v273 = vperm.slane %v239, 0
    %v274 = vperm.slane %v240, 0
    %v275 = vperm.slane %v241, 0
    %v276 = vperm.slane %v242, 0
    %278 = vst [vmem:[#allocation1] ss:$4 sm:$0xff] %v272
    %v279 = vld.sshfl [vmem:[#allocation1] sm:$0xff pattern:$0x73625140]
    %v280 = vld.sshfl [vmem:[#allocation1 + $0x8] sm:$0xff pattern:$0x73625140]
    %s281 = scalar_lea.vmem [#allocation1], 32
    %282 = vst [vmem:[%s281] ss:$4 sm:$0xff] %v272
    %v283 = vld.sshfl [vmem:[#allocation1 + $0x20] sm:$0xff pattern:$0x73625140]
    %v284 = vld.sshfl [vmem:[#allocation1 + $0x28] sm:$0xff pattern:$0x73625140]
    %v289 = vmul.f32 %v273, %v279
    %v290 = vmul.f32 %v274, %v280
    %v291 = vmul.f32 %v275, %v283
    %v292 = vmul.f32 %v276, %v284
    %v293 = vsel %vm218, %v289, 0.0
    %v294 = vsel %vm218, %v290, 0.0
    %v295 = vadd.f32 %v293, %v294
    %296 = vadd.xlane.f32.xlu0 %v295
    %v297 = vpop.xlane.xlu0 %296
    %v298 = vsel %vm218, %v291, 0.0
    %v299 = vsel %vm218, %v292, 0.0
    %v300 = vadd.f32 %v298, %v299
    %301 = vadd.xlane.f32.xlu0 %v300
    %v302 = vpop.xlane.xlu0 %301
    %v303 = vld [vmem:[#allocation11] sm:$0x1]
    %v305 = vperm.slane %v303, 0
    %v306 = vlaneseq
    %v307 = vshrl.u32 %v306, 7
    %309 = vset.pattern.permute.xlu0 %v307
    %310 = vperm.xlu0 %309, %v305
    %v311 = vpop.permute.xlu0 %310
    %v313 = vsub.f32 %v297, %v311
    %v314 = vsub.f32 %v302, %v311
    %317 = vset.pattern.permute.xlu0 0
    %318 = vperm.xlu0 %317, %v313
    %v319 = vpop.permute.xlu0 %318
    %320 = vset.pattern.permute.xlu0 0
    %321 = vperm.xlu0 %320, %v314
    %v322 = vpop.permute.xlu0 %321
    %v323 = vlaneseq
    %v324 = vand.u32 %v323, 127
    %v325 = vperm.slane %v319, %v324
    %v326 = vperm.slane %v322, %v324
    %v327 = vsel %vm213, %v326, %v325
    %vm329 = vcmask 9216
    %330 = vst.msk [vmem:[#allocation17] sm:$0x3] %vm329, %v327
    %vm331 = vcmp.gt.f32.partialorder %v313, 0.0
    %vm332 = vcmp.gt.f32.partialorder %v314, 0.0
    %v333 = vsel %vm331, 1, 0
    %v334 = vsel %vm332, 1, 0
    %v335 = vcvt.s32.f32 %v333
    %v336 = vcvt.s32.f32 %v334
    %339 = vset.pattern.permute.xlu0 0
    %340 = vperm.xlu0 %339, %v335
    %v341 = vpop.permute.xlu0 %340
    %342 = vset.pattern.permute.xlu0 0
    %343 = vperm.xlu0 %342, %v336
    %v344 = vpop.permute.xlu0 %343
    %v345 = vperm.slane %v341, %v324
    %v346 = vperm.slane %v344, %v324
    %v347 = vsel %vm213, %v346, %v345
    %v349 = vsel %vm329, %v347, 0.0
    %350 = vadd.xlane.f32.xlu0 %v349
    %v351 = vpop.xlane.xlu0 %350
    %vm352 = vcmask 1024
    %353 = vst.msk [vmem:[%s11] sm:$0x3] %vm352, %v351
    // Predicated region
    $region62: #{tpu_custom_call.1} parent=1 // pred_check
      _
    $region63: #{tpu_custom_call.1} parent=1 // pred_check_branch
      %355 = sbr.rel target = $region65
    $region64: #{tpu_custom_call.1} parent=1 // pred_region
      %356 = sst [smem:[#allocation21]] [#allocation20]
      %357 = sst [smem:[#allocation22]] [#allocation19]
    $region65: #{tpu_custom_call.1} parent=1 // pred_fallthru
      _
    %359 = shalt.err (0)
    %s361 = sshll.u32 [#allocation17], 4
    %s362 = int_to_ptr.vmem [resolvable:$true] %s361
    %364 = dma.vmem_to_smem %s362, 32, [#allocation3], [#allocation4]
    %s365 = smul.u32 2, 1
    %s366 = sshll.u32 %s365, 4
    %367 = dma.done [#allocation4], %s366
    %368 = sfence
    %s369 = sld [smem:[#allocation3]]
    %s370 = sld [smem:[#allocation3 + $0x1]]
    %p371 = scmp.gt.f32.partialorder %s369, 0.0
    %p372 = scmp.gt.f32.partialorder %s370, 0.0
    %s373 = scalar_select %p371, 1, 0
    %s374 = scvt.s32.f32 %s373
    %s375 = scalar_select %p372, 1, 0
    %s376 = scvt.s32.f32 %s375
    %s377 = sadd.f32 %s374, %s376
    %s378 = smax.f32 %s377, 1.0
    %v379 = vstv %s378
    %v380 = vrcp.pop %v379
    %v381 = vmul.f32 %v379, %v380
    %v382 = vsub.f32 1.0, %v381
    %v383 = vmul.f32 %v380, %v382
    %v384 = vadd.f32 %v380, %v383
    %vm385 = vweird.f32 %v379
    %vm386 = vweird.f32 %v380
    %vm387 = vmor %vm385, %vm386
    %v388 = vsel %vm387, %v380, %v384
    %v389 = vand.u32 2147483647, %v379
    %vm390 = vcmp.eq.f32.partialorder %v389, 8.507059e+37
    %v391 = vand.u32 %v379, 2147483648
    %v392 = vor.u32 1.1754944e-38, %v391
    %v393 = vsel %vm390, %v392, %v388
    %s394 = vtos %v393
    %s395 = scalar_select %p372, %s370, 0.0
    %s396 = smul.f32 %s395, %s394
    %v397 = vstv %s396
    %v398 = vmul.f32 %v397, %v125
    %v399 = vmul.f32 %v397, %v126
    %v400 = vmul.f32 %v397, %v127
    %v401 = vmul.f32 %v397, %v128
    %402 = vst [vmem:[#allocation16] sm:$0xff] %v398
    %403 = vst [vmem:[#allocation16 + $0x8] sm:$0xff] %v399
    %404 = vst [vmem:[#allocation16 + $0x10] sm:$0xff] %v400
    %405 = vst [vmem:[#allocation16 + $0x18] sm:$0xff] %v401
    // Predicated region
    $region66: #{tpu_custom_call.1} parent=1 // pred_check
      %p406 = pneg %p371
    $region67: #{tpu_custom_call.1} parent=1 // pred_check_branch
      %408 = sbr.rel (%p406) target = $region69
    $region68: #{tpu_custom_call.1} parent=1 // pred_region
      %v409 = vld [vmem:[%s4] sm:$0x3]
      %v410 = vmul.f32 %v125, %v125
      %v411 = vmul.f32 %v126, %v126
      %v412 = vmul.f32 %v127, %v127
      %v413 = vmul.f32 %v128, %v128
      %v414 = vadd.f32 %v410, %v411
      %415 = vadd.xlane.f32.xlu0 %v414
      %v416 = vpop.xlane.xlu0 %415
      %v417 = vadd.f32 %v412, %v413
      %418 = vadd.xlane.f32.xlu0 %v417
      %v419 = vpop.xlane.xlu0 %418
      %v420 = vrcp.pop 256.0
      %v421 = vmul.f32 256.0, %v420
      %v422 = vsub.f32 1.0, %v421
      %v423 = vmul.f32 %v420, %v422
      %v424 = vadd.f32 %v420, %v423
      %vm425 = vweird.f32 %v420
      %v426 = vsel %vm425, %v420, %v424
      %v427 = vmul.f32 %v416, %v426
      %v428 = vmul.f32 %v419, %v426
      %v429 = vadd.f32 %v427, 1e-08
      %v430 = vadd.f32 %v428, 1e-08
      %v431 = vrsqrt.pop %v429
      %v432 = vmul.f32 %v431, %v429
      %v433 = vmul.f32 %v432, %v431
      %v434 = vmul.f32 0.5, %v433
      %v435 = vsub.f32 1.5, %v434
      %v436 = vmul.f32 %v431, %v435
      %vm437 = vweird.f32 %v429
      %vm438 = vweird.f32 %v431
      %vm439 = vmor %vm437, %vm438
      %v440 = vsel %vm439, %v431, %v436
      %v441 = vrsqrt.pop %v430
      %v442 = vmul.f32 %v441, %v430
      %v443 = vmul.f32 %v442, %v441
      %v444 = vmul.f32 0.5, %v443
      %v445 = vsub.f32 1.5, %v444
      %v446 = vmul.f32 %v441, %v445
      %vm447 = vweird.f32 %v430
      %vm448 = vweird.f32 %v441
      %vm449 = vmor %vm447, %vm448
      %v450 = vsel %vm449, %v441, %v446
      %v451 = vmul.f32 %v125, %v440
      %v452 = vmul.f32 %v126, %v440
      %v453 = vmul.f32 %v127, %v450
      %v454 = vmul.f32 %v128, %v450
      %v456 = vperm.slane %v409, 0
      %v457 = vperm.slane %v409, 1
      %v460 = vmul.f32 %v451, %v456
      %v461 = vmul.f32 %v452, %v457
      %v462 = vmul.f32 %v453, %v456
      %v463 = vmul.f32 %v454, %v457
      %v464 = vpack.c.bf16 %v461, %v460
      %v465 = vpack.c.bf16 %v463, %v462
      %466 = vst [vmem:[#allocation2] sm:$0xff] %v464
      %467 = vst [vmem:[#allocation2 + $0x8] sm:$0xff] %v465
      %v468 = vld [vmem:[%s5] sm:$0x3]
      %v469 = vmul.f32 %v129, %v129
      %v470 = vmul.f32 %v130, %v130
      %v471 = vmul.f32 %v131, %v131
      %v472 = vmul.f32 %v132, %v132
      %v473 = vadd.f32 %v469, %v470
      %474 = vadd.xlane.f32.xlu0 %v473
      %v475 = vpop.xlane.xlu0 %474
      %v476 = vadd.f32 %v471, %v472
      %477 = vadd.xlane.f32.xlu0 %v476
      %v478 = vpop.xlane.xlu0 %477
      %v479 = vmul.f32 %v475, %v426
      %v480 = vmul.f32 %v478, %v426
      %v481 = vadd.f32 %v479, 1e-08
      %v482 = vadd.f32 %v480, 1e-08
      %v483 = vrsqrt.pop %v481
      %v484 = vmul.f32 %v483, %v481
      %v485 = vmul.f32 %v484, %v483
      %v486 = vmul.f32 0.5, %v485
      %v487 = vsub.f32 1.5, %v486
      %v488 = vmul.f32 %v483, %v487
      %vm489 = vweird.f32 %v481
      %vm490 = vweird.f32 %v483
      %vm491 = vmor %vm489, %vm490
      %v492 = vsel %vm491, %v483, %v488
      %v493 = vrsqrt.pop %v482
      %v494 = vmul.f32 %v493, %v482
      %v495 = vmul.f32 %v494, %v493
      %v496 = vmul.f32 0.5, %v495
      %v497 = vsub.f32 1.5, %v496
      %v498 = vmul.f32 %v493, %v497
      %vm499 = vweird.f32 %v482
      %vm500 = vweird.f32 %v493
      %vm501 = vmor %vm499, %vm500
      %v502 = vsel %vm501, %v493, %v498
      %v503 = vmul.f32 %v129, %v492
      %v504 = vmul.f32 %v130, %v492
      %v505 = vmul.f32 %v131, %v502
      %v506 = vmul.f32 %v132, %v502
      %v508 = vperm.slane %v468, 0
      %v509 = vperm.slane %v468, 1
      %v512 = vmul.f32 %v503, %v508
      %v513 = vmul.f32 %v504, %v509
      %v514 = vmul.f32 %v505, %v508
      %v515 = vmul.f32 %v506, %v509
      %v516 = vpack.c.bf16 %v513, %v512
      %v517 = vpack.c.bf16 %v515, %v514
      %518 = vst [vmem:[#allocation2 + $0x10] sm:$0xff] %v516
      %519 = vst [vmem:[#allocation2 + $0x18] sm:$0xff] %v517
      %v520 = vld [vmem:[#allocation2] sm:$0xff]
      %v521 = vld [vmem:[#allocation2 + $0x8] sm:$0xff]
      %v522 = vld [vmem:[#allocation2 + $0x10] sm:$0xff]
      %v523 = vld [vmem:[#allocation2 + $0x18] sm:$0xff]
      %v524 = vld [vmem:[#allocation13] sm:$0xff]
      %v525 = vld [vmem:[#allocation13 + $0x8] sm:$0xff]
      %v526 = vld [vmem:[#allocation13 + $0x10] sm:$0xff]
      %v527 = vld [vmem:[#allocation13 + $0x18] sm:$0xff]
      %v528 = vld [vmem:[#allocation13 + $0x20] sm:$0xff]
      %v529 = vld [vmem:[#allocation13 + $0x28] sm:$0xff]
      %v530 = vld [vmem:[#allocation13 + $0x30] sm:$0xff]
      %v531 = vld [vmem:[#allocation13 + $0x38] sm:$0xff]
      %v532 = vld [vmem:[#allocation13 + $0x40] sm:$0xff]
      %v533 = vld [vmem:[#allocation13 + $0x48] sm:$0xff]
      %v534 = vld [vmem:[#allocation13 + $0x50] sm:$0xff]
      %v535 = vld [vmem:[#allocation13 + $0x58] sm:$0xff]
      %v536 = vld [vmem:[#allocation13 + $0x60] sm:$0xff]
      %v537 = vld [vmem:[#allocation13 + $0x68] sm:$0xff]
      %v538 = vld [vmem:[#allocation13 + $0x70] sm:$0xff]
      %v539 = vld [vmem:[#allocation13 + $0x78] sm:$0xff]
      %v540 = vld [vmem:[#allocation13 + $0x80] sm:$0xff]
      %v541 = vld [vmem:[#allocation13 + $0x88] sm:$0xff]
      %v542 = vld [vmem:[#allocation13 + $0x90] sm:$0xff]
      %v543 = vld [vmem:[#allocation13 + $0x98] sm:$0xff]
      %v544 = vld [vmem:[#allocation13 + $0xa0] sm:$0xff]
      %v545 = vld [vmem:[#allocation13 + $0xa8] sm:$0xff]
      %v546 = vld [vmem:[#allocation13 + $0xb0] sm:$0xff]
      %v547 = vld [vmem:[#allocation13 + $0xb8] sm:$0xff]
      %v548 = vld [vmem:[#allocation13 + $0xc0] sm:$0xff]
      %v549 = vld [vmem:[#allocation13 + $0xc8] sm:$0xff]
      %v550 = vld [vmem:[#allocation13 + $0xd0] sm:$0xff]
      %v551 = vld [vmem:[#allocation13 + $0xd8] sm:$0xff]
      %v552 = vld [vmem:[#allocation13 + $0xe0] sm:$0xff]
      %v553 = vld [vmem:[#allocation13 + $0xe8] sm:$0xff]
      %v554 = vld [vmem:[#allocation13 + $0xf0] sm:$0xff]
      %v555 = vld [vmem:[#allocation13 + $0xf8] sm:$0xff]
      %v556 = vld [vmem:[#allocation13 + $0x100] sm:$0xff]
      %v557 = vld [vmem:[#allocation13 + $0x108] sm:$0xff]
      %v558 = vld [vmem:[#allocation13 + $0x110] sm:$0xff]
      %v559 = vld [vmem:[#allocation13 + $0x118] sm:$0xff]
      %v560 = vld [vmem:[#allocation13 + $0x120] sm:$0xff]
      %v561 = vld [vmem:[#allocation13 + $0x128] sm:$0xff]
      %v562 = vld [vmem:[#allocation13 + $0x130] sm:$0xff]
      %v563 = vld [vmem:[#allocation13 + $0x138] sm:$0xff]
      %v564 = vld [vmem:[#allocation13 + $0x140] sm:$0xff]
      %v565 = vld [vmem:[#allocation13 + $0x148] sm:$0xff]
      %v566 = vld [vmem:[#allocation13 + $0x150] sm:$0xff]
      %v567 = vld [vmem:[#allocation13 + $0x158] sm:$0xff]
      %v568 = vld [vmem:[#allocation13 + $0x160] sm:$0xff]
      %v569 = vld [vmem:[#allocation13 + $0x168] sm:$0xff]
      %v570 = vld [vmem:[#allocation13 + $0x170] sm:$0xff]
      %v571 = vld [vmem:[#allocation13 + $0x178] sm:$0xff]
      %v572 = vld [vmem:[#allocation13 + $0x180] sm:$0xff]
      %v573 = vld [vmem:[#allocation13 + $0x188] sm:$0xff]
      %v574 = vld [vmem:[#allocation13 + $0x190] sm:$0xff]
      %v575 = vld [vmem:[#allocation13 + $0x198] sm:$0xff]
      %v576 = vld [vmem:[#allocation13 + $0x1a0] sm:$0xff]
      %v577 = vld [vmem:[#allocation13 + $0x1a8] sm:$0xff]
      %v578 = vld [vmem:[#allocation13 + $0x1b0] sm:$0xff]
      %v579 = vld [vmem:[#allocation13 + $0x1b8] sm:$0xff]
      %v580 = vld [vmem:[#allocation13 + $0x1c0] sm:$0xff]
      %v581 = vld [vmem:[#allocation13 + $0x1c8] sm:$0xff]
      %v582 = vld [vmem:[#allocation13 + $0x1d0] sm:$0xff]
      %v583 = vld [vmem:[#allocation13 + $0x1d8] sm:$0xff]
      %v584 = vld [vmem:[#allocation13 + $0x1e0] sm:$0xff]
      %v585 = vld [vmem:[#allocation13 + $0x1e8] sm:$0xff]
      %v586 = vld [vmem:[#allocation13 + $0x1f0] sm:$0xff]
      %v587 = vld [vmem:[#allocation13 + $0x1f8] sm:$0xff]
      %v592 = vunpack.c.l.b16 %v520
      %v593 = vunpack.c.h.b16 %v520
      %v594 = vunpack.c.l.b16 %v521
      %v595 = vunpack.c.h.b16 %v521
      %v596 = vunpack.c.l.b16 %v522
      %v597 = vunpack.c.h.b16 %v522
      %v598 = vunpack.c.l.b16 %v523
      %v599 = vunpack.c.h.b16 %v523
      %v600 = vpack.c.b16 %v594, %v592
      %v601 = vpack.c.b16 %v595, %v593
      %v602 = vpack.c.b16 %v598, %v596
      %v603 = vpack.c.b16 %v599, %v597
      %v672 = vunpack.c.l.b16 %v524
      %v673 = vunpack.c.h.b16 %v524
      %v674 = vunpack.c.l.b16 %v525
      %v675 = vunpack.c.h.b16 %v525
      %v676 = vunpack.c.l.b16 %v526
      %v677 = vunpack.c.h.b16 %v526
      %v678 = vunpack.c.l.b16 %v527
      %v679 = vunpack.c.h.b16 %v527
      %v680 = vunpack.c.l.b16 %v528
      %v681 = vunpack.c.h.b16 %v528
      %v682 = vunpack.c.l.b16 %v529
      %v683 = vunpack.c.h.b16 %v529
      %v684 = vunpack.c.l.b16 %v530
      %v685 = vunpack.c.h.b16 %v530
      %v686 = vunpack.c.l.b16 %v531
      %v687 = vunpack.c.h.b16 %v531
      %v688 = vunpack.c.l.b16 %v532
      %v689 = vunpack.c.h.b16 %v532
      %v690 = vunpack.c.l.b16 %v533
      %v691 = vunpack.c.h.b16 %v533
      %v692 = vunpack.c.l.b16 %v534
      %v693 = vunpack.c.h.b16 %v534
      %v694 = vunpack.c.l.b16 %v535
      %v695 = vunpack.c.h.b16 %v535
      %v696 = vunpack.c.l.b16 %v536
      %v697 = vunpack.c.h.b16 %v536
      %v698 = vunpack.c.l.b16 %v537
      %v699 = vunpack.c.h.b16 %v537
      %v700 = vunpack.c.l.b16 %v538
      %v701 = vunpack.c.h.b16 %v538
      %v702 = vunpack.c.l.b16 %v539
      %v703 = vunpack.c.h.b16 %v539
      %v704 = vunpack.c.l.b16 %v540
      %v705 = vunpack.c.h.b16 %v540
      %v706 = vunpack.c.l.b16 %v541
      %v707 = vunpack.c.h.b16 %v541
      %v708 = vunpack.c.l.b16 %v542
      %v709 = vunpack.c.h.b16 %v542
      %v710 = vunpack.c.l.b16 %v543
      %v711 = vunpack.c.h.b16 %v543
      %v712 = vunpack.c.l.b16 %v544
      %v713 = vunpack.c.h.b16 %v544
      %v714 = vunpack.c.l.b16 %v545
      %v715 = vunpack.c.h.b16 %v545
      %v716 = vunpack.c.l.b16 %v546
      %v717 = vunpack.c.h.b16 %v546
      %v718 = vunpack.c.l.b16 %v547
      %v719 = vunpack.c.h.b16 %v547
      %v720 = vunpack.c.l.b16 %v548
      %v721 = vunpack.c.h.b16 %v548
      %v722 = vunpack.c.l.b16 %v549
      %v723 = vunpack.c.h.b16 %v549
      %v724 = vunpack.c.l.b16 %v550
      %v725 = vunpack.c.h.b16 %v550
      %v726 = vunpack.c.l.b16 %v551
      %v727 = vunpack.c.h.b16 %v551
      %v728 = vunpack.c.l.b16 %v552
      %v729 = vunpack.c.h.b16 %v552
      %v730 = vunpack.c.l.b16 %v553
      %v731 = vunpack.c.h.b16 %v553
      %v732 = vunpack.c.l.b16 %v554
      %v733 = vunpack.c.h.b16 %v554
      %v734 = vunpack.c.l.b16 %v555
      %v735 = vunpack.c.h.b16 %v555
      %v736 = vunpack.c.l.b16 %v556
      %v737 = vunpack.c.h.b16 %v556
      %v738 = vunpack.c.l.b16 %v557
      %v739 = vunpack.c.h.b16 %v557
      %v740 = vunpack.c.l.b16 %v558
      %v741 = vunpack.c.h.b16 %v558
      %v742 = vunpack.c.l.b16 %v559
      %v743 = vunpack.c.h.b16 %v559
      %v744 = vunpack.c.l.b16 %v560
      %v745 = vunpack.c.h.b16 %v560
      %v746 = vunpack.c.l.b16 %v561
      %v747 = vunpack.c.h.b16 %v561
      %v748 = vunpack.c.l.b16 %v562
      %v749 = vunpack.c.h.b16 %v562
      %v750 = vunpack.c.l.b16 %v563
      %v751 = vunpack.c.h.b16 %v563
      %v752 = vunpack.c.l.b16 %v564
      %v753 = vunpack.c.h.b16 %v564
      %v754 = vunpack.c.l.b16 %v565
      %v755 = vunpack.c.h.b16 %v565
      %v756 = vunpack.c.l.b16 %v566
      %v757 = vunpack.c.h.b16 %v566
      %v758 = vunpack.c.l.b16 %v567
      %v759 = vunpack.c.h.b16 %v567
      %v760 = vunpack.c.l.b16 %v568
      %v761 = vunpack.c.h.b16 %v568
      %v762 = vunpack.c.l.b16 %v569
      %v763 = vunpack.c.h.b16 %v569
      %v764 = vunpack.c.l.b16 %v570
      %v765 = vunpack.c.h.b16 %v570
      %v766 = vunpack.c.l.b16 %v571
      %v767 = vunpack.c.h.b16 %v571
      %v768 = vunpack.c.l.b16 %v572
      %v769 = vunpack.c.h.b16 %v572
      %v770 = vunpack.c.l.b16 %v573
      %v771 = vunpack.c.h.b16 %v573
      %v772 = vunpack.c.l.b16 %v574
      %v773 = vunpack.c.h.b16 %v574
      %v774 = vunpack.c.l.b16 %v575
      %v775 = vunpack.c.h.b16 %v575
      %v776 = vunpack.c.l.b16 %v576
      %v777 = vunpack.c.h.b16 %v576
      %v778 = vunpack.c.l.b16 %v577
      %v779 = vunpack.c.h.b16 %v577
      %v780 = vunpack.c.l.b16 %v578
      %v781 = vunpack.c.h.b16 %v578
      %v782 = vunpack.c.l.b16 %v579
      %v783 = vunpack.c.h.b16 %v579
      %v784 = vunpack.c.l.b16 %v580
      %v785 = vunpack.c.h.b16 %v580
      %v786 = vunpack.c.l.b16 %v581
      %v787 = vunpack.c.h.b16 %v581
      %v788 = vunpack.c.l.b16 %v582
      %v789 = vunpack.c.h.b16 %v582
      %v790 = vunpack.c.l.b16 %v583
      %v791 = vunpack.c.h.b16 %v583
      %v792 = vunpack.c.l.b16 %v584
      %v793 = vunpack.c.h.b16 %v584
      %v794 = vunpack.c.l.b16 %v585
      %v795 = vunpack.c.h.b16 %v585
      %v796 = vunpack.c.l.b16 %v586
      %v797 = vunpack.c.h.b16 %v586
      %v798 = vunpack.c.l.b16 %v587
      %v799 = vunpack.c.h.b16 %v587
      %v800 = vpack.c.b16 %v674, %v672
      %v801 = vpack.c.b16 %v675, %v673
      %v802 = vpack.c.b16 %v678, %v676
      %v803 = vpack.c.b16 %v679, %v677
      %v804 = vpack.c.b16 %v682, %v680
      %v805 = vpack.c.b16 %v683, %v681
      %v806 = vpack.c.b16 %v686, %v684
      %v807 = vpack.c.b16 %v687, %v685
      %v808 = vpack.c.b16 %v690, %v688
      %v809 = vpack.c.b16 %v691, %v689
      %v810 = vpack.c.b16 %v694, %v692
      %v811 = vpack.c.b16 %v695, %v693
      %v812 = vpack.c.b16 %v698, %v696
      %v813 = vpack.c.b16 %v699, %v697
      %v814 = vpack.c.b16 %v702, %v700
      %v815 = vpack.c.b16 %v703, %v701
      %v816 = vpack.c.b16 %v706, %v704
      %v817 = vpack.c.b16 %v707, %v705
      %v818 = vpack.c.b16 %v710, %v708
      %v819 = vpack.c.b16 %v711, %v709
      %v820 = vpack.c.b16 %v714, %v712
      %v821 = vpack.c.b16 %v715, %v713
      %v822 = vpack.c.b16 %v718, %v716
      %v823 = vpack.c.b16 %v719, %v717
      %v824 = vpack.c.b16 %v722, %v720
      %v825 = vpack.c.b16 %v723, %v721
      %v826 = vpack.c.b16 %v726, %v724
      %v827 = vpack.c.b16 %v727, %v725
      %v828 = vpack.c.b16 %v730, %v728
      %v829 = vpack.c.b16 %v731, %v729
      %v830 = vpack.c.b16 %v734, %v732
      %v831 = vpack.c.b16 %v735, %v733
      %v832 = vpack.c.b16 %v738, %v736
      %v833 = vpack.c.b16 %v739, %v737
      %v834 = vpack.c.b16 %v742, %v740
      %v835 = vpack.c.b16 %v743, %v741
      %v836 = vpack.c.b16 %v746, %v744
      %v837 = vpack.c.b16 %v747, %v745
      %v838 = vpack.c.b16 %v750, %v748
      %v839 = vpack.c.b16 %v751, %v749
      %v840 = vpack.c.b16 %v754, %v752
      %v841 = vpack.c.b16 %v755, %v753
      %v842 = vpack.c.b16 %v758, %v756
      %v843 = vpack.c.b16 %v759, %v757
      %v844 = vpack.c.b16 %v762, %v760
      %v845 = vpack.c.b16 %v763, %v761
      %v846 = vpack.c.b16 %v766, %v764
      %v847 = vpack.c.b16 %v767, %v765
      %v848 = vpack.c.b16 %v770, %v768
      %v849 = vpack.c.b16 %v771, %v769
      %v850 = vpack.c.b16 %v774, %v772
      %v851 = vpack.c.b16 %v775, %v773
      %v852 = vpack.c.b16 %v778, %v776
      %v853 = vpack.c.b16 %v779, %v777
      %v854 = vpack.c.b16 %v782, %v780
      %v855 = vpack.c.b16 %v783, %v781
      %v856 = vpack.c.b16 %v786, %v784
      %v857 = vpack.c.b16 %v787, %v785
      %v858 = vpack.c.b16 %v790, %v788
      %v859 = vpack.c.b16 %v791, %v789
      %v860 = vpack.c.b16 %v794, %v792
      %v861 = vpack.c.b16 %v795, %v793
      %v862 = vpack.c.b16 %v798, %v796
      %v863 = vpack.c.b16 %v799, %v797
      %928 = vmatpush.bf16.xpose.msra.mxu0 %v814
      %929 = vmatpush.bf16.xpose.msra.mxu0 %v812
      %930 = vmatpush.bf16.xpose.msra.mxu0 %v810
      %931 = vmatpush.bf16.xpose.msra.mxu0 %v808
      %932 = vmatpush.bf16.xpose.msra.mxu0 %v806
      %933 = vmatpush.bf16.xpose.msra.mxu0 %v804
      %934 = vmatpush.bf16.xpose.msra.mxu0 %v802
      %935 = vmatpush.bf16.xpose.msra.mxu0 %v800
      %936 = vmatmul.bf16.gmra.mxu0 %v600
      %v937 = vpop.f32.mrf.mxu0
      %v938 = vadd.f32 0.0, %v937
      %v939 = vpop.f32.mrf.mxu0
      %v940 = vadd.f32 0.0, %v939
      %941 = vmatmul.bf16.gmra.mxu0 %v602
      %v942 = vpop.f32.mrf.mxu0
      %v943 = vpop.f32.mrf.mxu0
      %944 = vdwg.mxu0
      %945 = vmatpush.bf16.xpose.msra.mxu0 %v815
      %946 = vmatpush.bf16.xpose.msra.mxu0 %v813
      %947 = vmatpush.bf16.xpose.msra.mxu0 %v811
      %948 = vmatpush.bf16.xpose.msra.mxu0 %v809
      %949 = vmatpush.bf16.xpose.msra.mxu0 %v807
      %950 = vmatpush.bf16.xpose.msra.mxu0 %v805
      %951 = vmatpush.bf16.xpose.msra.mxu0 %v803
      %952 = vmatpush.bf16.xpose.msra.mxu0 %v801
      %953 = vmatmul.bf16.gmra.mxu0 %v601
      %v954 = vpop.f32.mrf.mxu0
      %v955 = vadd.f32 %v938, %v954
      %v956 = vpop.f32.mrf.mxu0
      %v957 = vadd.f32 %v940, %v956
      %958 = vmatmul.bf16.gmra.mxu0 %v603
      %v959 = vpop.f32.mrf.mxu0
      %v960 = vpop.f32.mrf.mxu0
      %961 = vdwg.mxu0
      %962 = vmatpush.bf16.xpose.msra.mxu0 %v830
      %963 = vmatpush.bf16.xpose.msra.mxu0 %v828
      %964 = vmatpush.bf16.xpose.msra.mxu0 %v826
      %965 = vmatpush.bf16.xpose.msra.mxu0 %v824
      %966 = vmatpush.bf16.xpose.msra.mxu0 %v822
      %967 = vmatpush.bf16.xpose.msra.mxu0 %v820
      %968 = vmatpush.bf16.xpose.msra.mxu0 %v818
      %969 = vmatpush.bf16.xpose.msra.mxu0 %v816
      %970 = vmatmul.bf16.gmra.mxu0 %v600
      %v971 = vpop.f32.mrf.mxu0
      %v972 = vadd.f32 0.0, %v971
      %v973 = vpop.f32.mrf.mxu0
      %v974 = vadd.f32 0.0, %v973
      %975 = vmatmul.bf16.gmra.mxu0 %v602
      %v976 = vpop.f32.mrf.mxu0
      %v977 = vpop.f32.mrf.mxu0
      %978 = vdwg.mxu0
      %979 = vmatpush.bf16.xpose.msra.mxu0 %v831
      %980 = vmatpush.bf16.xpose.msra.mxu0 %v829
      %981 = vmatpush.bf16.xpose.msra.mxu0 %v827
      %982 = vmatpush.bf16.xpose.msra.mxu0 %v825
      %983 = vmatpush.bf16.xpose.msra.mxu0 %v823
      %984 = vmatpush.bf16.xpose.msra.mxu0 %v821
      %985 = vmatpush.bf16.xpose.msra.mxu0 %v819
      %986 = vmatpush.bf16.xpose.msra.mxu0 %v817
      %987 = vmatmul.bf16.gmra.mxu0 %v601
      %v988 = vpop.f32.mrf.mxu0
      %v989 = vadd.f32 %v972, %v988
      %v990 = vpop.f32.mrf.mxu0
      %v991 = vadd.f32 %v974, %v990
      %992 = vmatmul.bf16.gmra.mxu0 %v603
      %v993 = vpop.f32.mrf.mxu0
      %v994 = vpop.f32.mrf.mxu0
      %995 = vdwg.mxu0
      %996 = vmatpush.bf16.xpose.msra.mxu0 %v846
      %997 = vmatpush.bf16.xpose.msra.mxu0 %v844
      %998 = vmatpush.bf16.xpose.msra.mxu0 %v842
      %999 = vmatpush.bf16.xpose.msra.mxu0 %v840
      %1000 = vmatpush.bf16.xpose.msra.mxu0 %v838
      %1001 = vmatpush.bf16.xpose.msra.mxu0 %v836
      %1002 = vmatpush.bf16.xpose.msra.mxu0 %v834
      %1003 = vmatpush.bf16.xpose.msra.mxu0 %v832
      %1004 = vmatmul.bf16.gmra.mxu0 %v600
      %v1005 = vpop.f32.mrf.mxu0
      %v1006 = vpop.f32.mrf.mxu0
      %1007 = vmatmul.bf16.gmra.mxu0 %v602
      %v1008 = vpop.f32.mrf.mxu0
      %v1009 = vadd.f32 0.0, %v1008
      %v1010 = vpop.f32.mrf.mxu0
      %v1011 = vadd.f32 0.0, %v1010
      %1012 = vdwg.mxu0
      %1013 = vmatpush.bf16.xpose.msra.mxu0 %v847
      %1014 = vmatpush.bf16.xpose.msra.mxu0 %v845
      %1015 = vmatpush.bf16.xpose.msra.mxu0 %v843
      %1016 = vmatpush.bf16.xpose.msra.mxu0 %v841
      %1017 = vmatpush.bf16.xpose.msra.mxu0 %v839
      %1018 = vmatpush.bf16.xpose.msra.mxu0 %v837
      %1019 = vmatpush.bf16.xpose.msra.mxu0 %v835
      %1020 = vmatpush.bf16.xpose.msra.mxu0 %v833
      %1021 = vmatmul.bf16.gmra.mxu0 %v601
      %v1022 = vpop.f32.mrf.mxu0
      %v1023 = vpop.f32.mrf.mxu0
      %1024 = vmatmul.bf16.gmra.mxu0 %v603
      %v1025 = vpop.f32.mrf.mxu0
      %v1026 = vadd.f32 %v1009, %v1025
      %v1027 = vpop.f32.mrf.mxu0
      %v1028 = vadd.f32 %v1011, %v1027
      %1029 = vdwg.mxu0
      %1030 = vmatpush.bf16.xpose.msra.mxu0 %v862
      %1031 = vmatpush.bf16.xpose.msra.mxu0 %v860
      %1032 = vmatpush.bf16.xpose.msra.mxu0 %v858
      %1033 = vmatpush.bf16.xpose.msra.mxu0 %v856
      %1034 = vmatpush.bf16.xpose.msra.mxu0 %v854
      %1035 = vmatpush.bf16.xpose.msra.mxu0 %v852
      %1036 = vmatpush.bf16.xpose.msra.mxu0 %v850
      %1037 = vmatpush.bf16.xpose.msra.mxu0 %v848
      %1038 = vmatmul.bf16.gmra.mxu0 %v600
      %v1039 = vpop.f32.mrf.mxu0
      %v1040 = vpop.f32.mrf.mxu0
      %1041 = vmatmul.bf16.gmra.mxu0 %v602
      %v1042 = vpop.f32.mrf.mxu0
      %v1043 = vadd.f32 0.0, %v1042
      %v1044 = vpop.f32.mrf.mxu0
      %v1045 = vadd.f32 0.0, %v1044
      %1046 = vdwg.mxu0
      %1047 = vmatpush.bf16.xpose.msra.mxu0 %v863
      %1048 = vmatpush.bf16.xpose.msra.mxu0 %v861
      %1049 = vmatpush.bf16.xpose.msra.mxu0 %v859
      %1050 = vmatpush.bf16.xpose.msra.mxu0 %v857
      %1051 = vmatpush.bf16.xpose.msra.mxu0 %v855
      %1052 = vmatpush.bf16.xpose.msra.mxu0 %v853
      %1053 = vmatpush.bf16.xpose.msra.mxu0 %v851
      %1054 = vmatpush.bf16.xpose.msra.mxu0 %v849
      %1055 = vmatmul.bf16.gmra.mxu0 %v601
      %v1056 = vpop.f32.mrf.mxu0
      %v1057 = vpop.f32.mrf.mxu0
      %1058 = vmatmul.bf16.gmra.mxu0 %v603
      %v1059 = vpop.f32.mrf.mxu0
      %v1060 = vadd.f32 %v1043, %v1059
      %v1061 = vpop.f32.mrf.mxu0
      %v1062 = vadd.f32 %v1045, %v1061
      %1063 = vdwg.mxu0
      %v1064 = vld [vmem:[%s7] sm:$0x3]
      %v1066 = vperm.slane %v1064, 0
      %v1067 = vperm.slane %v1064, 1
      %v1070 = vadd.f32 %v955, %v1066
      %v1071 = vadd.f32 %v989, %v1067
      %v1072 = vadd.f32 %v957, %v1066
      %v1073 = vadd.f32 %v991, %v1067
      %vm1074 = vcmp.gt.f32.partialorder %v1070, 0.0
      %vm1075 = vcmp.gt.f32.partialorder %v1071, 0.0
      %vm1076 = vcmp.gt.f32.partialorder %v1072, 0.0
      %vm1077 = vcmp.gt.f32.partialorder %v1073, 0.0
      %v1078 = vmin.f32 %v1070, 0.0
      %v1079 = vmin.f32 %v1071, 0.0
      %v1080 = vmin.f32 %v1072, 0.0
      %v1081 = vmin.f32 %v1073, 0.0
      %v1082 = vmul.f32 %v1078, 1.442695
      %v1083 = vpow.pop %v1082
      %v1084 = vmul.f32 %v1079, 1.442695
      %v1085 = vpow.pop %v1084
      %v1086 = vmul.f32 %v1080, 1.442695
      %v1087 = vpow.pop %v1086
      %v1088 = vmul.f32 %v1081, 1.442695
      %v1089 = vpow.pop %v1088
      %v1090 = vsub.f32 %v1083, 1.0
      %v1091 = vsub.f32 %v1085, 1.0
      %v1092 = vsub.f32 %v1087, 1.0
      %v1093 = vsub.f32 %v1089, 1.0
      %v1094 = vsel %vm1074, %v1070, %v1090
      %v1095 = vsel %vm1075, %v1071, %v1091
      %v1096 = vsel %vm1076, %v1072, %v1092
      %v1097 = vsel %vm1077, %v1073, %v1093
      %v1098 = vld [vmem:[#allocation14] sm:$0x3]
      %v1100 = vperm.slane %v1098, 0
      %v1101 = vperm.slane %v1098, 1
      %v1104 = vadd.f32 %v1026, %v1100
      %v1105 = vadd.f32 %v1060, %v1101
      %v1106 = vadd.f32 %v1028, %v1100
      %v1107 = vadd.f32 %v1062, %v1101
      %vm1108 = vcmp.gt.f32.partialorder %v1104, 0.0
      %vm1109 = vcmp.gt.f32.partialorder %v1105, 0.0
      %vm1110 = vcmp.gt.f32.partialorder %v1106, 0.0
      %vm1111 = vcmp.gt.f32.partialorder %v1107, 0.0
      %v1112 = vmin.f32 %v1104, 0.0
      %v1113 = vmin.f32 %v1105, 0.0
      %v1114 = vmin.f32 %v1106, 0.0
      %v1115 = vmin.f32 %v1107, 0.0
      %v1116 = vmul.f32 %v1112, 1.442695
      %v1117 = vpow.pop %v1116
      %v1118 = vmul.f32 %v1113, 1.442695
      %v1119 = vpow.pop %v1118
      %v1120 = vmul.f32 %v1114, 1.442695
      %v1121 = vpow.pop %v1120
      %v1122 = vmul.f32 %v1115, 1.442695
      %v1123 = vpow.pop %v1122
      %v1124 = vsub.f32 %v1117, 1.0
      %v1125 = vsub.f32 %v1119, 1.0
      %v1126 = vsub.f32 %v1121, 1.0
      %v1127 = vsub.f32 %v1123, 1.0
      %v1128 = vsel %vm1108, %v1104, %v1124
      %v1129 = vsel %vm1109, %v1105, %v1125
      %v1130 = vsel %vm1110, %v1106, %v1126
      %v1131 = vsel %vm1111, %v1107, %v1127
      %v1132 = vrot.slane %v1128, 4
      %v1133 = vadd.f32 %v1128, %v1132
      %v1134 = vrot.slane %v1133, 2
      %v1135 = vadd.f32 %v1133, %v1134
      %v1136 = vrot.slane %v1135, 1
      %v1137 = vadd.f32 %v1135, %v1136
      %v1138 = vrot.slane %v1129, 4
      %v1139 = vadd.f32 %v1129, %v1138
      %v1140 = vrot.slane %v1139, 2
      %v1141 = vadd.f32 %v1139, %v1140
      %v1142 = vrot.slane %v1141, 1
      %v1143 = vadd.f32 %v1141, %v1142
      %v1144 = vrot.slane %v1130, 4
      %v1145 = vadd.f32 %v1130, %v1144
      %v1146 = vrot.slane %v1145, 2
      %v1147 = vadd.f32 %v1145, %v1146
      %v1148 = vrot.slane %v1147, 1
      %v1149 = vadd.f32 %v1147, %v1148
      %v1150 = vrot.slane %v1131, 4
      %v1151 = vadd.f32 %v1131, %v1150
      %v1152 = vrot.slane %v1151, 2
      %v1153 = vadd.f32 %v1151, %v1152
      %v1154 = vrot.slane %v1153, 1
      %v1155 = vadd.f32 %v1153, %v1154
      %v1156 = vmul.f32 %v1137, %v163
      %v1157 = vmul.f32 %v1143, %v163
      %v1158 = vmul.f32 %v1149, %v163
      %v1159 = vmul.f32 %v1155, %v163
      %v1160 = vadd.f32 %v1094, %v1156
      %v1161 = vadd.f32 %v1095, %v1157
      %v1162 = vadd.f32 %v1096, %v1158
      %v1163 = vadd.f32 %v1097, %v1159
      %s1164 = smul.f32 %s369, %s394
      %v1165 = vld [vmem:[#allocation16] sm:$0xff]
      %v1166 = vld [vmem:[#allocation16 + $0x8] sm:$0xff]
      %v1167 = vld [vmem:[#allocation16 + $0x10] sm:$0xff]
      %v1168 = vld [vmem:[#allocation16 + $0x18] sm:$0xff]
      %v1169 = vstv %s1164
      %v1170 = vmul.f32 %v1169, %v1160
      %v1171 = vmul.f32 %v1169, %v1161
      %v1172 = vmul.f32 %v1169, %v1162
      %v1173 = vmul.f32 %v1169, %v1163
      %v1174 = vadd.f32 %v1165, %v1170
      %v1175 = vadd.f32 %v1166, %v1171
      %v1176 = vadd.f32 %v1167, %v1172
      %v1177 = vadd.f32 %v1168, %v1173
      %1178 = vst [vmem:[#allocation16] sm:$0xff] %v1174
      %1179 = vst [vmem:[#allocation16 + $0x8] sm:$0xff] %v1175
      %1180 = vst [vmem:[#allocation16 + $0x10] sm:$0xff] %v1176
      %1181 = vst [vmem:[#allocation16 + $0x18] sm:$0xff] %v1177
    $region69: #{tpu_custom_call.1} parent=1 // pred_fallthru
      _
    // Predicated region
    $region70: #{tpu_custom_call.1} parent=1 // pred_check
      _
    $region71: #{tpu_custom_call.1} parent=1 // pred_check_branch
      %1183 = sbr.rel (0) target = $region73
    $region72: #{tpu_custom_call.1} parent=1 // pred_region
      %1185 = vsyncadd [#allocation7], 0
      %s1186 = sshll.u32 [#allocation16], 4
      %s1187 = int_to_ptr.vmem [resolvable:$true] %s1186
      %s1188 = sshll.u32 %s9, 4
      %s1189 = int_to_ptr.hbm [resolvable:$true] %s1188
      %1194 = dma.vmem_to_hbm [thread:$0]  %s1187, 512, %s1189, [#allocation7], 256, 256, 16
    $region73: #{tpu_custom_call.1} parent=1 // pred_fallthru
      _
    // Predicated region
    $region74: #{tpu_custom_call.1} parent=1 // pred_check
      _
    $region75: #{tpu_custom_call.1} parent=1 // pred_check_branch
      %1196 = sbr.rel (0) target = $region77
    $region76: #{tpu_custom_call.1} parent=1 // pred_region
      %1198 = vsyncadd [#allocation18], 0
      %s1200 = sshll.u32 [#allocation17], 4
      %s1201 = int_to_ptr.vmem [resolvable:$true] %s1200
      %s1202 = sshll.u32 %s10, 4
      %s1203 = int_to_ptr.hbm [resolvable:$true] %s1202
      %1205 = dma.vmem_to_hbm [thread:$0]  %s1201, 32, %s1203, [#allocation18]
    $region77: #{tpu_custom_call.1} parent=1 // pred_fallthru
      _
    // Predicated region
    $region78: #{tpu_custom_call.1} parent=1 // pred_check
      _
    $region79: #{tpu_custom_call.1} parent=1 // pred_check_branch
      %1207 = sbr.rel (0) target = $region81
    $region80: #{tpu_custom_call.1} parent=1 // pred_region
      _
    $region81: #{tpu_custom_call.1} parent=1 // pred_fallthru
      _
    // Predicated region
    $region82: #{tpu_custom_call.1} parent=1 // pred_check
      _
    $region83: #{tpu_custom_call.1} parent=1 // pred_check_branch
      %1209 = sbr.rel (0) target = $region85
    $region84: #{tpu_custom_call.1} parent=1 // pred_region
      %1211 = dma.done [#allocation7], 512
    $region85: #{tpu_custom_call.1} parent=1 // pred_fallthru
      _
    // Predicated region
    $region86: #{tpu_custom_call.1} parent=1 // pred_check
      _
    $region87: #{tpu_custom_call.1} parent=1 // pred_check_branch
      %1213 = sbr.rel (0) target = $region89
    $region88: #{tpu_custom_call.1} parent=1 // pred_region
      %1215 = dma.done [#allocation18], 32
    $region89: #{tpu_custom_call.1} parent=1 // pred_fallthru
      _
    // Predicated region
    $region90: #{tpu_custom_call.1} parent=1 // pred_check
      _
    $region91: #{tpu_custom_call.1} parent=1 // pred_check_branch
      %1217 = sbr.rel (0) target = $region93
    $region92: #{tpu_custom_call.1} parent=1 // pred_region
      _
    $region93: #{tpu_custom_call.1} parent=1 // pred_fallthru
      _
    %1218 = vsyncpa [#allocation6], 1
    %1219 = vsyncpa [#allocation9], 1
    %1220 = vsyncpa [#allocation12], 1
    %1221 = vsyncpa [#allocation15], 1
    %1222 = vsyncpa [#allocation7], 1
    %1223 = vsyncpa [#allocation18], 1
  %1224 = vsyncmov [#allocation4]
  %s1225 = vpop.sfrf %1224
  %p1226 = scmp.eq.s32.totalorder %s1225, 0
  %p1227 = pneg %p1226
  %1229 = shalt.err (%p1227)

</llo_original>
